<compile_context>
chip_gen: v6e
topology: v6e:2x2x1
jax: 0.10.0
libtpu: 0.0.40
codegen_flags: <defaults>
</compile_context>

<pallas_src>
import jax
import jax.numpy as jnp
from jax import lax
from jax.experimental import pallas as pl
from jax.experimental.pallas import tpu as pltpu


# ----------------------------- small helpers --------------------------------

def _round_up(x, m):
    return (x + m - 1) // m * m


def _pick_chunk(n, target):
    """Largest divisor of n that is <= target."""
    c = min(n, target)
    while n % c:
        c -= 1
    return c


def _pick_tile(n, candidates):
    """First candidate that divides n; fall back to n itself."""
    for c in candidates:
        if c <= n and n % c == 0:
            return c
    return n


# ------------------------------- kernels -------------------------------------

def rnn_recurrence_kernel(x_ref, w_ref, b_ref, hs_ref, h_carry):
    """One T-chunk of the tanh-RNN recurrence.

    x_ref  : (tT, Bp, Ep)     compute dtype   time-major embedding chunk
    w_ref  : (Ep + Hp, Hp)    compute dtype   fused [W_ih; W_hh]
    b_ref  : (1, Hp)          float32         fused b_ih + b_hh
    hs_ref : (tT, Bp, Hp)     compute dtype   hidden states for this chunk (out)
    h_carry: (Bp, Hp)         float32 scratch hidden state across grid steps
    """
    @pl.when(pl.program_id(0) == 0)
    def _():
        h_carry[...] = jnp.zeros_like(h_carry)

    t_chunk = x_ref.shape[0]
    w = w_ref[...]
    bias = jnp.broadcast_to(b_ref[...], h_carry.shape)  # hoisted (no per-iter bcast)
    h0 = h_carry[...]                                    # hidden state in vregs

    def step(t, h):
        x_t = x_ref[t]                                               # (Bp, Ep)
        xh = jnp.concatenate([x_t, h.astype(x_t.dtype)], axis=-1)    # (Bp, Ep+Hp)
        pre = jnp.dot(xh, w, preferred_element_type=jnp.float32) + bias
        h_new = jnp.tanh(pre)                                        # f32, EUP
        hs_ref[t] = h_new.astype(hs_ref.dtype)
        return h_new

    h_final = lax.fori_loop(0, t_chunk, step, h0, unroll=True)
    h_carry[...] = h_final


def output_proj_kernel(hs_ref, w_ref, b_ref, out_ref):
    """Batched LM-head projection tile: (tm, Hp) @ (Hp, tn) + b."""
    out_ref[...] = (
        jnp.dot(hs_ref[...], w_ref[...], preferred_element_type=jnp.float32)
        + b_ref[...]
    ).astype(out_ref.dtype)


# ------------------------------- forward --------------------------------------

def language_model_forward(indices, lengths, params, *,
                           compute_dtype=jnp.bfloat16,
                           t_chunk_target=16):
    """Equivalent of LanguageModel.forward(indices, lengths) -> (B, T, V) logits."""
    del lengths  # the torch forward never uses `lengths` either

    emb = params["embedding"]                      # (V, E), row 0 == 0 (padding_idx)
    w_ih, w_hh = params["w_ih"], params["w_hh"]    # (E, H), (H, H)
    b_ih, b_hh = params["b_ih"], params["b_hh"]    # (1, H)
    w_out, b_out = params["w_out"], params["b_out"]  # (H, V), (1, V)

    B, T = indices.shape
    E, H = w_ih.shape
    V = w_out.shape[1]

    f32 = jnp.float32
    Bp = _round_up(B, 16)
    Ep = _round_up(E, 128)
    Hp = _round_up(H, 128)
    Vp = _round_up(V, 128)

    # --- parameter packing (zero padding keeps the math exact) ------------------
    emb_p = jnp.zeros((V, Ep), compute_dtype).at[:, :E].set(emb.astype(compute_dtype))
    w_rec = jnp.zeros((Ep + Hp, Hp), compute_dtype)
    w_rec = w_rec.at[:E, :H].set(w_ih.astype(compute_dtype))
    w_rec = w_rec.at[Ep:Ep + H, :H].set(w_hh.astype(compute_dtype))
    b_rec = jnp.zeros((1, Hp), f32).at[:, :H].set((b_ih + b_hh).astype(f32))
    w_out_p = jnp.zeros((Hp, Vp), compute_dtype).at[:H, :V].set(
        w_out.astype(compute_dtype))
    b_out_p = jnp.zeros((1, Vp), f32).at[:, :V].set(b_out.astype(f32))

    # --- time-major embedding gather (no (B,T,E) transpose round-trip) ----------
    embeds = jnp.take(emb_p, indices.T, axis=0)               # (T, B, Ep)
    embeds = jnp.pad(embeds, ((0, 0), (0, Bp - B), (0, 0)))   # (T, Bp, Ep)

    # --- kernel 1: recurrence, grid over T chunks --------------------------------
    tT = _pick_chunk(T, t_chunk_target)
    hs = pl.pallas_call(
        rnn_recurrence_kernel,
        out_shape=jax.ShapeDtypeStruct((T, Bp, Hp), compute_dtype),
        grid_spec=pltpu.PrefetchScalarGridSpec(
            num_scalar_prefetch=0,
            grid=(T // tT,),
            in_specs=[
                pl.BlockSpec((tT, Bp, Ep), lambda i: (i, 0, 0)),
                pl.BlockSpec((Ep + Hp, Hp), lambda i: (0, 0)),
                pl.BlockSpec((1, Hp), lambda i: (0, 0)),
            ],
            out_specs=pl.BlockSpec((tT, Bp, Hp), lambda i: (i, 0, 0)),
            scratch_shapes=[pltpu.VMEM((Bp, Hp), f32)],
        ),
        compiler_params=pltpu.CompilerParams(
            dimension_semantics=("arbitrary",)),
    )(embeds, w_rec, b_rec)

    # --- kernel 2: one large batched projection (T*Bp, Hp) @ (Hp, Vp) ------------
    M = T * Bp
    hs2d = hs.reshape(M, Hp)
    tm = _pick_tile(M, (512, 256, 128, 64, 32, 16))
    tn = _pick_tile(Vp, (512, 256, 128))

    logits_p = pl.pallas_call(
        output_proj_kernel,
        out_shape=jax.ShapeDtypeStruct((M, Vp), f32),
        grid_spec=pltpu.PrefetchScalarGridSpec(
            num_scalar_prefetch=0,
            grid=(M // tm, Vp // tn),
            in_specs=[
                pl.BlockSpec((tm, Hp), lambda i, j: (i, 0)),
                pl.BlockSpec((Hp, tn), lambda i, j: (0, j)),
                pl.BlockSpec((1, tn), lambda i, j: (0, j)),
            ],
            out_specs=pl.BlockSpec((tm, tn), lambda i, j: (i, j)),
        ),
        compiler_params=pltpu.CompilerParams(
            dimension_semantics=("parallel", "parallel")),
    )(hs2d, w_out_p, b_out_p)

    logits = logits_p.reshape(T, Bp, Vp)[:, :B, :V]   # strip padding -> (T, B, V)
    return jnp.transpose(logits, (1, 0, 2))           # (B, T, V), matches batch_first


# --------------------------- params & reference ------------------------------

def init_params(key, vocab_size, embed_size, hidden_size):
    """Deterministic synthetic init mirroring the nn.Module parameter shapes."""
    ks = jax.random.split(key, 7)
    k = 1.0 / jnp.sqrt(hidden_size)

    emb = jax.random.normal(ks[0], (vocab_size, embed_size), jnp.float32)
    emb = emb.at[0].set(0.0)  # padding_idx=0 row zeroed

    # nn.RNN stores (H, E)/(H, H) and applies x @ W^T; we store transposed.
    w_ih = jax.random.uniform(ks[1], (embed_size, hidden_size), jnp.float32, -k, k)
    w_hh = jax.random.uniform(ks[2], (hidden_size, hidden_size), jnp.float32, -k, k)
    b_ih = jax.random.uniform(ks[3], (1, hidden_size), jnp.float32, -k, k)
    b_hh = jax.random.uniform(ks[4], (1, hidden_size), jnp.float32, -k, k)

    # nn.Linear stores (V, H) and applies h @ W^T; we store transposed.
    w_out = jax.random.uniform(ks[5], (hidden_size, vocab_size), jnp.float32, -k, k)
    b_out = jax.random.uniform(ks[6], (1, vocab_size), jnp.float32, -k, k)

    return dict(embedding=emb, w_ih=w_ih, w_hh=w_hh, b_ih=b_ih, b_hh=b_hh,
                w_out=w_out, b_out=b_out)


def reference_forward(indices, params):
    """Pure-JAX reference of the same computation (for sanity check)."""
    embeds = jnp.take(params["embedding"], indices, axis=0)   # (B, T, E)
    B = embeds.shape[0]
    H = params["w_hh"].shape[0]
    h = jnp.zeros((B, H), jnp.float32)

    def step(h, x_t):
        h_new = jnp.tanh(x_t @ params["w_ih"] + h @ params["w_hh"]
                         + params["b_ih"] + params["b_hh"])
        logits_t = h_new @ params["w_out"] + params["b_out"]
        return h_new, logits_t

    _, logits = lax.scan(step, h, jnp.transpose(embeds, (1, 0, 2)))
    return jnp.transpose(logits, (1, 0, 2))


# ---------------------------------- main --------------------------------------

if __name__ == "__main__":
    # Small shapes consistent with the module: batch=2, seq=8, embed=32,
    # hidden=32, vocab=64 (single-layer tanh RNN, default rnn_type=nn.RNN).
    B, T, E, H, V = 2, 8, 32, 32, 64

    key = jax.random.PRNGKey(0)
    k_param, k_idx = jax.random.split(key)
    params = init_params(k_param, vocab_size=V, embed_size=E, hidden_size=H)

    indices = jax.random.randint(k_idx, (B, T), minval=0, maxval=V, dtype=jnp.int32)
    lengths = jnp.array([T, T - 2], dtype=jnp.int32)  # unused (matches torch forward)

    ref = reference_forward(indices, params)

    # f32 MXU path (v5e-safe): must match the pure-JAX reference tightly.
    logits_f32 = jax.block_until_ready(
        language_model_forward(indices, lengths, params, compute_dtype=jnp.float32))
    assert logits_f32.shape == (B, T, V), logits_f32.shape
    assert jnp.allclose(logits_f32, ref, atol=1e-3, rtol=1e-3), "f32 mismatch vs reference"

    # bf16 MXU operands, f32 accumulation / tanh / biases (v6e / v7x perf path).
    logits_bf16 = jax.block_until_ready(
        language_model_forward(indices, lengths, params, compute_dtype=jnp.bfloat16))
    assert logits_bf16.shape == (B, T, V), logits_bf16.shape
    assert jnp.allclose(logits_bf16, ref, atol=5e-2, rtol=5e-2), "bf16 mismatch vs reference"

    # TODO(synk): `inference()` (autoregressive Categorical sampling) is host-side
    # control flow around the same forward pieces; not implemented as a kernel.
    print("KERNEL_OK")
</pallas_src>

<mosaic_0001>
module attributes {stable_mosaic.version = 11 : i64} {
  func.func @rnn_recurrence_kernel(%arg0: i32, %arg1: memref<8x16x128xf32, #tpu.memory_space<vmem>>, %arg2: memref<256x128xf32, #tpu.memory_space<vmem>>, %arg3: memref<1x128xf32, #tpu.memory_space<vmem>>, %arg4: memref<8x16x128xf32, #tpu.memory_space<vmem>>, %arg5: memref<16x128xf32, #tpu.memory_space<vmem>>) attributes {dimension_semantics = [#tpu.dimension_semantics<arbitrary>], iteration_bounds = array<i64: 1>, scalar_prefetch = 0 : i64, scratch_operands = 1 : i64, tpu.core_type = #tpu.core_type<tc>, window_params = [{transform_indices = @transform_0, window_bounds = array<i64: 8, 16, 128>}, {pipeline_mode = #tpu.pipeline_mode<synchronous>, transform_indices = @transform_1, window_bounds = array<i64: 256, 128>}, {pipeline_mode = #tpu.pipeline_mode<synchronous>, transform_indices = @transform_2, window_bounds = array<i64: 1, 128>}, {transform_indices = @transform_3, window_bounds = array<i64: 8, 16, 128>}]} {
    %c0_i32 = arith.constant 0 : i32
    %0 = arith.cmpi eq, %arg0, %c0_i32 : i32
    %1 = arith.extui %0 : i1 to i32
    %c0_i32_0 = arith.constant 0 : i32
    %2 = arith.cmpi ne, %1, %c0_i32_0 : i32
    scf.if %2 {
      %cst_48 = arith.constant 0.000000e+00 : f32
      %97 = vector.broadcast %cst_48 : f32 to vector<16x128xf32>
      %c0_49 = arith.constant 0 : index
      %c0_50 = arith.constant 0 : index
      %98 = vector.load %arg5[%c0_49, %c0_50] : memref<16x128xf32, #tpu.memory_space<vmem>>, vector<16x128xf32>
      tpu.vector_store %arg5[%c0_49, %c0_50], %97 {strides = array<i32>} : memref<16x128xf32, #tpu.memory_space<vmem>>, vector<16x128xf32>,
    } else {
    }
    %c0 = arith.constant 0 : index
    %c0_1 = arith.constant 0 : index
    %3 = vector.load %arg2[%c0, %c0_1] : memref<256x128xf32, #tpu.memory_space<vmem>>, vector<256x128xf32>
    %c0_2 = arith.constant 0 : index
    %c0_3 = arith.constant 0 : index
    %4 = vector.load %arg3[%c0_2, %c0_3] : memref<1x128xf32, #tpu.memory_space<vmem>>, vector<1x128xf32>
    %5 = vector.shape_cast %4 : vector<1x128xf32> to vector<1x128xf32>
    %6 = vector.broadcast %5 : vector<1x128xf32> to vector<16x128xf32>
    %c0_4 = arith.constant 0 : index
    %c0_5 = arith.constant 0 : index
    %7 = vector.load %arg5[%c0_4, %c0_5] : memref<16x128xf32, #tpu.memory_space<vmem>>, vector<16x128xf32>
    %c0_i32_6 = arith.constant 0 : i32
    %8 = arith.index_cast %c0_i32_6 : i32 to index
    %c0_7 = arith.constant 0 : index
    %c0_8 = arith.constant 0 : index
    %9 = vector.load %arg1[%8, %c0_7, %c0_8] : memref<8x16x128xf32, #tpu.memory_space<vmem>>, vector<1x16x128xf32>
    %10 = vector.shape_cast %9 : vector<1x16x128xf32> to vector<16x128xf32>
    %11 = tpu.concatenate %10, %7 in 1 : vector<16x128xf32>, vector<16x128xf32> -> vector<16x256xf32>
    %cst = arith.constant dense<0.000000e+00> : vector<16x128xf32>
    %12 = tpu.matmul %11, %3, %cst {dimension_numbers = #tpu.dot_dimension_numbers<[1], [0], [0], [1], [0, 0, 1, 1], [], []>} : vector<16x256xf32>, vector<256x128xf32>, vector<16x128xf32> -> vector<16x128xf32>
    %13 = arith.addf %12, %6 : vector<16x128xf32>
    %14 = math.tanh %13 : vector<16x128xf32>
    %15 = arith.index_cast %c0_i32_6 : i32 to index
    %c0_9 = arith.constant 0 : index
    %c0_10 = arith.constant 0 : index
    %16 = vector.load %arg4[%15, %c0_9, %c0_10] : memref<8x16x128xf32, #tpu.memory_space<vmem>>, vector<1x16x128xf32>
    %17 = vector.shape_cast %16 : vector<1x16x128xf32> to vector<16x128xf32>
    %18 = vector.shape_cast %14 : vector<16x128xf32> to vector<1x16x128xf32>
    tpu.vector_store %arg4[%15, %c0_9, %c0_10], %18 {strides = array<i32>} : memref<8x16x128xf32, #tpu.memory_space<vmem>>, vector<1x16x128xf32>,
    %c1_i32 = arith.constant 1 : i32
    %19 = arith.index_cast %c1_i32 : i32 to index
    %c0_11 = arith.constant 0 : index
    %c0_12 = arith.constant 0 : index
    %20 = vector.load %arg1[%19, %c0_11, %c0_12] : memref<8x16x128xf32, #tpu.memory_space<vmem>>, vector<1x16x128xf32>
    %21 = vector.shape_cast %20 : vector<1x16x128xf32> to vector<16x128xf32>
    %22 = tpu.concatenate %21, %14 in 1 : vector<16x128xf32>, vector<16x128xf32> -> vector<16x256xf32>
    %cst_13 = arith.constant dense<0.000000e+00> : vector<16x128xf32>
    %23 = tpu.matmul %22, %3, %cst_13 {dimension_numbers = #tpu.dot_dimension_numbers<[1], [0], [0], [1], [0, 0, 1, 1], [], []>} : vector<16x256xf32>, vector<256x128xf32>, vector<16x128xf32> -> vector<16x128xf32>
    %24 = arith.addf %23, %6 : vector<16x128xf32>
    %25 = math.tanh %24 : vector<16x128xf32>
    %26 = arith.index_cast %c1_i32 : i32 to index
    %c0_14 = arith.constant 0 : index
    %c0_15 = arith.constant 0 : index
    %27 = vector.load %arg4[%26, %c0_14, %c0_15] : memref<8x16x128xf32, #tpu.memory_space<vmem>>, vector<1x16x128xf32>
    %28 = vector.shape_cast %27 : vector<1x16x128xf32> to vector<16x128xf32>
    %29 = vector.shape_cast %25 : vector<16x128xf32> to vector<1x16x128xf32>
    tpu.vector_store %arg4[%26, %c0_14, %c0_15], %29 {strides = array<i32>} : memref<8x16x128xf32, #tpu.memory_space<vmem>>, vector<1x16x128xf32>,
    %c2_i32 = arith.constant 2 : i32
    %30 = arith.index_cast %c2_i32 : i32 to index
    %c0_16 = arith.constant 0 : index
    %c0_17 = arith.constant 0 : index
    %31 = vector.load %arg1[%30, %c0_16, %c0_17] : memref<8x16x128xf32, #tpu.memory_space<vmem>>, vector<1x16x128xf32>
    %32 = vector.shape_cast %31 : vector<1x16x128xf32> to vector<16x128xf32>
    %33 = tpu.concatenate %32, %25 in 1 : vector<16x128xf32>, vector<16x128xf32> -> vector<16x256xf32>
    %cst_18 = arith.constant dense<0.000000e+00> : vector<16x128xf32>
    %34 = tpu.matmul %33, %3, %cst_18 {dimension_numbers = #tpu.dot_dimension_numbers<[1], [0], [0], [1], [0, 0, 1, 1], [], []>} : vector<16x256xf32>, vector<256x128xf32>, vector<16x128xf32> -> vector<16x128xf32>
    %35 = arith.addf %34, %6 : vector<16x128xf32>
    %36 = math.tanh %35 : vector<16x128xf32>
    %37 = arith.index_cast %c2_i32 : i32 to index
    %c0_19 = arith.constant 0 : index
    %c0_20 = arith.constant 0 : index
    %38 = vector.load %arg4[%37, %c0_19, %c0_20] : memref<8x16x128xf32, #tpu.memory_space<vmem>>, vector<1x16x128xf32>
    %39 = vector.shape_cast %38 : vector<1x16x128xf32> to vector<16x128xf32>
    %40 = vector.shape_cast %36 : vector<16x128xf32> to vector<1x16x128xf32>
    tpu.vector_store %arg4[%37, %c0_19, %c0_20], %40 {strides = array<i32>} : memref<8x16x128xf32, #tpu.memory_space<vmem>>, vector<1x16x128xf32>,
    %c3_i32 = arith.constant 3 : i32
    %41 = arith.index_cast %c3_i32 : i32 to index
    %c0_21 = arith.constant 0 : index
    %c0_22 = arith.constant 0 : index
    %42 = vector.load %arg1[%41, %c0_21, %c0_22] : memref<8x16x128xf32, #tpu.memory_space<vmem>>, vector<1x16x128xf32>
    %43 = vector.shape_cast %42 : vector<1x16x128xf32> to vector<16x128xf32>
    %44 = tpu.concatenate %43, %36 in 1 : vector<16x128xf32>, vector<16x128xf32> -> vector<16x256xf32>
    %cst_23 = arith.constant dense<0.000000e+00> : vector<16x128xf32>
    %45 = tpu.matmul %44, %3, %cst_23 {dimension_numbers = #tpu.dot_dimension_numbers<[1], [0], [0], [1], [0, 0, 1, 1], [], []>} : vector<16x256xf32>, vector<256x128xf32>, vector<16x128xf32> -> vector<16x128xf32>
    %46 = arith.addf %45, %6 : vector<16x128xf32>
    %47 = math.tanh %46 : vector<16x128xf32>
    %48 = arith.index_cast %c3_i32 : i32 to index
    %c0_24 = arith.constant 0 : index
    %c0_25 = arith.constant 0 : index
    %49 = vector.load %arg4[%48, %c0_24, %c0_25] : memref<8x16x128xf32, #tpu.memory_space<vmem>>, vector<1x16x128xf32>
    %50 = vector.shape_cast %49 : vector<1x16x128xf32> to vector<16x128xf32>
    %51 = vector.shape_cast %47 : vector<16x128xf32> to vector<1x16x128xf32>
    tpu.vector_store %arg4[%48, %c0_24, %c0_25], %51 {strides = array<i32>} : memref<8x16x128xf32, #tpu.memory_space<vmem>>, vector<1x16x128xf32>,
    %c4_i32 = arith.constant 4 : i32
    %52 = arith.index_cast %c4_i32 : i32 to index
    %c0_26 = arith.constant 0 : index
    %c0_27 = arith.constant 0 : index
    %53 = vector.load %arg1[%52, %c0_26, %c0_27] : memref<8x16x128xf32, #tpu.memory_space<vmem>>, vector<1x16x128xf32>
    %54 = vector.shape_cast %53 : vector<1x16x128xf32> to vector<16x128xf32>
    %55 = tpu.concatenate %54, %47 in 1 : vector<16x128xf32>, vector<16x128xf32> -> vector<16x256xf32>
    %cst_28 = arith.constant dense<0.000000e+00> : vector<16x128xf32>
    %56 = tpu.matmul %55, %3, %cst_28 {dimension_numbers = #tpu.dot_dimension_numbers<[1], [0], [0], [1], [0, 0, 1, 1], [], []>} : vector<16x256xf32>, vector<256x128xf32>, vector<16x128xf32> -> vector<16x128xf32>
    %57 = arith.addf %56, %6 : vector<16x128xf32>
    %58 = math.tanh %57 : vector<16x128xf32>
    %59 = arith.index_cast %c4_i32 : i32 to index
    %c0_29 = arith.constant 0 : index
    %c0_30 = arith.constant 0 : index
    %60 = vector.load %arg4[%59, %c0_29, %c0_30] : memref<8x16x128xf32, #tpu.memory_space<vmem>>, vector<1x16x128xf32>
    %61 = vector.shape_cast %60 : vector<1x16x128xf32> to vector<16x128xf32>
    %62 = vector.shape_cast %58 : vector<16x128xf32> to vector<1x16x128xf32>
    tpu.vector_store %arg4[%59, %c0_29, %c0_30], %62 {strides = array<i32>} : memref<8x16x128xf32, #tpu.memory_space<vmem>>, vector<1x16x128xf32>,
    %c5_i32 = arith.constant 5 : i32
    %63 = arith.index_cast %c5_i32 : i32 to index
    %c0_31 = arith.constant 0 : index
    %c0_32 = arith.constant 0 : index
    %64 = vector.load %arg1[%63, %c0_31, %c0_32] : memref<8x16x128xf32, #tpu.memory_space<vmem>>, vector<1x16x128xf32>
    %65 = vector.shape_cast %64 : vector<1x16x128xf32> to vector<16x128xf32>
    %66 = tpu.concatenate %65, %58 in 1 : vector<16x128xf32>, vector<16x128xf32> -> vector<16x256xf32>
    %cst_33 = arith.constant dense<0.000000e+00> : vector<16x128xf32>
    %67 = tpu.matmul %66, %3, %cst_33 {dimension_numbers = #tpu.dot_dimension_numbers<[1], [0], [0], [1], [0, 0, 1, 1], [], []>} : vector<16x256xf32>, vector<256x128xf32>, vector<16x128xf32> -> vector<16x128xf32>
    %68 = arith.addf %67, %6 : vector<16x128xf32>
    %69 = math.tanh %68 : vector<16x128xf32>
    %70 = arith.index_cast %c5_i32 : i32 to index
    %c0_34 = arith.constant 0 : index
    %c0_35 = arith.constant 0 : index
    %71 = vector.load %arg4[%70, %c0_34, %c0_35] : memref<8x16x128xf32, #tpu.memory_space<vmem>>, vector<1x16x128xf32>
    %72 = vector.shape_cast %71 : vector<1x16x128xf32> to vector<16x128xf32>
    %73 = vector.shape_cast %69 : vector<16x128xf32> to vector<1x16x128xf32>
    tpu.vector_store %arg4[%70, %c0_34, %c0_35], %73 {strides = array<i32>} : memref<8x16x128xf32, #tpu.memory_space<vmem>>, vector<1x16x128xf32>,
    %c6_i32 = arith.constant 6 : i32
    %74 = arith.index_cast %c6_i32 : i32 to index
    %c0_36 = arith.constant 0 : index
    %c0_37 = arith.constant 0 : index
    %75 = vector.load %arg1[%74, %c0_36, %c0_37] : memref<8x16x128xf32, #tpu.memory_space<vmem>>, vector<1x16x128xf32>
    %76 = vector.shape_cast %75 : vector<1x16x128xf32> to vector<16x128xf32>
    %77 = tpu.concatenate %76, %69 in 1 : vector<16x128xf32>, vector<16x128xf32> -> vector<16x256xf32>
    %cst_38 = arith.constant dense<0.000000e+00> : vector<16x128xf32>
    %78 = tpu.matmul %77, %3, %cst_38 {dimension_numbers = #tpu.dot_dimension_numbers<[1], [0], [0], [1], [0, 0, 1, 1], [], []>} : vector<16x256xf32>, vector<256x128xf32>, vector<16x128xf32> -> vector<16x128xf32>
    %79 = arith.addf %78, %6 : vector<16x128xf32>
    %80 = math.tanh %79 : vector<16x128xf32>
    %81 = arith.index_cast %c6_i32 : i32 to index
    %c0_39 = arith.constant 0 : index
    %c0_40 = arith.constant 0 : index
    %82 = vector.load %arg4[%81, %c0_39, %c0_40] : memref<8x16x128xf32, #tpu.memory_space<vmem>>, vector<1x16x128xf32>
    %83 = vector.shape_cast %82 : vector<1x16x128xf32> to vector<16x128xf32>
    %84 = vector.shape_cast %80 : vector<16x128xf32> to vector<1x16x128xf32>
    tpu.vector_store %arg4[%81, %c0_39, %c0_40], %84 {strides = array<i32>} : memref<8x16x128xf32, #tpu.memory_space<vmem>>, vector<1x16x128xf32>,
    %c7_i32 = arith.constant 7 : i32
    %85 = arith.index_cast %c7_i32 : i32 to index
    %c0_41 = arith.constant 0 : index
    %c0_42 = arith.constant 0 : index
    %86 = vector.load %arg1[%85, %c0_41, %c0_42] : memref<8x16x128xf32, #tpu.memory_space<vmem>>, vector<1x16x128xf32>
    %87 = vector.shape_cast %86 : vector<1x16x128xf32> to vector<16x128xf32>
    %88 = tpu.concatenate %87, %80 in 1 : vector<16x128xf32>, vector<16x128xf32> -> vector<16x256xf32>
    %cst_43 = arith.constant dense<0.000000e+00> : vector<16x128xf32>
    %89 = tpu.matmul %88, %3, %cst_43 {dimension_numbers = #tpu.dot_dimension_numbers<[1], [0], [0], [1], [0, 0, 1, 1], [], []>} : vector<16x256xf32>, vector<256x128xf32>, vector<16x128xf32> -> vector<16x128xf32>
    %90 = arith.addf %89, %6 : vector<16x128xf32>
    %91 = math.tanh %90 : vector<16x128xf32>
    %92 = arith.index_cast %c7_i32 : i32 to index
    %c0_44 = arith.constant 0 : index
    %c0_45 = arith.constant 0 : index
    %93 = vector.load %arg4[%92, %c0_44, %c0_45] : memref<8x16x128xf32, #tpu.memory_space<vmem>>, vector<1x16x128xf32>
    %94 = vector.shape_cast %93 : vector<1x16x128xf32> to vector<16x128xf32>
    %95 = vector.shape_cast %91 : vector<16x128xf32> to vector<1x16x128xf32>
    tpu.vector_store %arg4[%92, %c0_44, %c0_45], %95 {strides = array<i32>} : memref<8x16x128xf32, #tpu.memory_space<vmem>>, vector<1x16x128xf32>,
    %c8_i32 = arith.constant 8 : i32
    %c0_46 = arith.constant 0 : index
    %c0_47 = arith.constant 0 : index
    %96 = vector.load %arg5[%c0_46, %c0_47] : memref<16x128xf32, #tpu.memory_space<vmem>>, vector<16x128xf32>
    tpu.vector_store %arg5[%c0_46, %c0_47], %91 {strides = array<i32>} : memref<16x128xf32, #tpu.memory_space<vmem>>, vector<16x128xf32>,
    return
  }
  func.func @transform_0(%arg0: i32) -> (i32, i32, i32) {
    %c0_i32 = arith.constant 0 : i32
    %c0_i32_0 = arith.constant 0 : i32
    %c0_i32_1 = arith.constant 0 : i32
    return %arg0, %c0_i32, %c0_i32_0 : i32, i32, i32
  }
  func.func @transform_1(%arg0: i32) -> (i32, i32) {
    %c0_i32 = arith.constant 0 : i32
    %c0_i32_0 = arith.constant 0 : i32
    %c0_i32_1 = arith.constant 0 : i32
    return %c0_i32, %c0_i32_0 : i32, i32
  }
  func.func @transform_2(%arg0: i32) -> (i32, i32) {
    %c0_i32 = arith.constant 0 : i32
    %c0_i32_0 = arith.constant 0 : i32
    %c0_i32_1 = arith.constant 0 : i32
    return %c0_i32, %c0_i32_0 : i32, i32
  }
  func.func @transform_3(%arg0: i32) -> (i32, i32, i32) {
    %c0_i32 = arith.constant 0 : i32
    %c0_i32_0 = arith.constant 0 : i32
    %c0_i32_1 = arith.constant 0 : i32
    return %arg0, %c0_i32, %c0_i32_0 : i32, i32, i32
  }
}

</mosaic_0001>

<llo_original>
// kernel: tpu_custom_call.1
$region0: #{tpu_custom_call.1}
  #allocation0 [shape = 'u32[]', space=smem, size = 0x4, offset = 0x4, fixed_abs, tag = 'smem constant byte address 0x4 - core index']
  #allocation1 [shape = 'u32[144,128]{1,0:T(1,128)}', space=vmem, size = 0x12000, scoped, tag = 'internal scratch']
  #allocation2 [shape = 'f32[16,128]{1,0:T(8,128)}', space=vmem, size = 0x2000, scoped, tag = 'scratch operand']
  %s0 = inlined_call_operand.hbm [shape: f32[8,16,128], index: 0, kind: input, shape index: {}]
  %s1 = inlined_call_operand.hbm [shape: f32[256,128], index: 1, kind: input, shape index: {}]
  %s2 = inlined_call_operand.vmem [shape: f32[1,128], index: 2, kind: input, shape index: {}]
  %s3 = inlined_call_operand.hbm [shape: f32[8,16,128], index: 3, kind: output, shape index: {}]
  %s4 = sld [smem:[#allocation0]]
  $region34: #{tpu_custom_call.1} parent=0
    _
  %s6 = ssub.s32 1, %s4
  %s7 = scalar_select 0, %s6, %s4
  $region1: #{tpu_custom_call.1} parent=0
    #allocation3 [shape = 'u8[65536]{0}', space=vmem, size = 0x10000, scoped, tag = 'input window, operand 0, single buffered']
    #allocation4 [shape = 's32[1]{0}', space=sflag, size = 0x4, scoped, tag = 'scoped memory for tpu_custom_call.1']
    #allocation5 [shape = 's32[1]{0}', space=sflag, size = 0x4, scoped, tag = 'scoped memory for tpu_custom_call.1']
    #allocation6 [shape = 'u8[131072]{0}', space=vmem, size = 0x20000, scoped, tag = 'input window, operand 1, single buffered']
    #allocation7 [shape = 's32[1]{0}', space=sflag, size = 0x4, scoped, tag = 'scoped memory for tpu_custom_call.1']
    #allocation8 [shape = 'u8[65536]{0}', space=vmem, size = 0x10000, scoped, tag = 'output window, operand 0, single buffered']
    %8 = vsyncpa [#allocation4], 0
    %9 = vsyncpa [#allocation7], 0
    %10 = vsyncpa [#allocation5], 0
    // Predicated region
    $region2: #{tpu_custom_call.1} parent=1 // pred_check
      _
    $region3: #{tpu_custom_call.1} parent=1 // pred_check_branch
      %12 = sbr.rel (0) target = $region5
    $region4: #{tpu_custom_call.1} parent=1 // pred_region
      %s14 = ssub.s32 2048, 2048
      %15 = vsyncadd [#allocation4], %s14
      %s16 = sshll.u32 [#allocation3], 4
      %s17 = int_to_ptr.vmem [resolvable:$true] %s16
      %22 = dma.hbm_to_vmem [thread:$0]  %s0, 2048, %s17, [#allocation4], 128, 128, 8
    $region5: #{tpu_custom_call.1} parent=1 // pred_fallthru
      _
    // Predicated region
    $region6: #{tpu_custom_call.1} parent=1 // pred_check
      _
    $region7: #{tpu_custom_call.1} parent=1 // pred_check_branch
      %24 = sbr.rel (0) target = $region9
    $region8: #{tpu_custom_call.1} parent=1 // pred_region
      %s26 = ssub.s32 4096, 4096
      %27 = vsyncadd [#allocation7], %s26
      %s28 = sshll.u32 [#allocation6], 4
      %s29 = int_to_ptr.vmem [resolvable:$true] %s28
      %34 = dma.hbm_to_vmem [thread:$0]  %s1, 4096, %s29, [#allocation7], 128, 128, 8
    $region9: #{tpu_custom_call.1} parent=1 // pred_fallthru
      _
    // Predicated region
    $region10: #{tpu_custom_call.1} parent=1 // pred_check
      _
    $region11: #{tpu_custom_call.1} parent=1 // pred_check_branch
      %36 = sbr.rel (0) target = $region13
    $region12: #{tpu_custom_call.1} parent=1 // pred_region
      _
    $region13: #{tpu_custom_call.1} parent=1 // pred_fallthru
      _
    // Predicated region
    $region14: #{tpu_custom_call.1} parent=1 // pred_check
      _
    $region15: #{tpu_custom_call.1} parent=1 // pred_check_branch
      %38 = sbr.rel (0) target = $region17
    $region16: #{tpu_custom_call.1} parent=1 // pred_region
      %39 = dma.done [#allocation4], 2048
    $region17: #{tpu_custom_call.1} parent=1 // pred_fallthru
      _
    // Predicated region
    $region18: #{tpu_custom_call.1} parent=1 // pred_check
      _
    $region19: #{tpu_custom_call.1} parent=1 // pred_check_branch
      %41 = sbr.rel (0) target = $region21
    $region20: #{tpu_custom_call.1} parent=1 // pred_region
      %42 = dma.done [#allocation7], 4096
    $region21: #{tpu_custom_call.1} parent=1 // pred_fallthru
      _
    %p43 = scmp.eq.s32.totalorder 0, 0
    // Predicated region
    $region22: #{tpu_custom_call.1} parent=1 // pred_check
      %p44 = pneg %p43
    $region23: #{tpu_custom_call.1} parent=1 // pred_check_branch
      %46 = sbr.rel (%p44) target = $region25
    $region24: #{tpu_custom_call.1} parent=1 // pred_region
      %47 = vst [vmem:[#allocation2] sm:$0xff] 0.0
      %48 = vst [vmem:[#allocation2 + $0x8] sm:$0xff] 0.0
    $region25: #{tpu_custom_call.1} parent=1 // pred_fallthru
      _
    %v49 = vld [vmem:[#allocation6] sm:$0xff]
    %v50 = vld [vmem:[#allocation6 + $0x8] sm:$0xff]
    %v51 = vld [vmem:[#allocation6 + $0x10] sm:$0xff]
    %v52 = vld [vmem:[#allocation6 + $0x18] sm:$0xff]
    %v53 = vld [vmem:[#allocation6 + $0x20] sm:$0xff]
    %v54 = vld [vmem:[#allocation6 + $0x28] sm:$0xff]
    %v55 = vld [vmem:[#allocation6 + $0x30] sm:$0xff]
    %v56 = vld [vmem:[#allocation6 + $0x38] sm:$0xff]
    %v57 = vld [vmem:[#allocation6 + $0x40] sm:$0xff]
    %v58 = vld [vmem:[#allocation6 + $0x48] sm:$0xff]
    %v59 = vld [vmem:[#allocation6 + $0x50] sm:$0xff]
    %v60 = vld [vmem:[#allocation6 + $0x58] sm:$0xff]
    %v61 = vld [vmem:[#allocation6 + $0x60] sm:$0xff]
    %v62 = vld [vmem:[#allocation6 + $0x68] sm:$0xff]
    %v63 = vld [vmem:[#allocation6 + $0x70] sm:$0xff]
    %v64 = vld [vmem:[#allocation6 + $0x78] sm:$0xff]
    %v65 = vld [vmem:[#allocation6 + $0x80] sm:$0xff]
    %v66 = vld [vmem:[#allocation6 + $0x88] sm:$0xff]
    %v67 = vld [vmem:[#allocation6 + $0x90] sm:$0xff]
    %v68 = vld [vmem:[#allocation6 + $0x98] sm:$0xff]
    %v69 = vld [vmem:[#allocation6 + $0xa0] sm:$0xff]
    %v70 = vld [vmem:[#allocation6 + $0xa8] sm:$0xff]
    %v71 = vld [vmem:[#allocation6 + $0xb0] sm:$0xff]
    %v72 = vld [vmem:[#allocation6 + $0xb8] sm:$0xff]
    %v73 = vld [vmem:[#allocation6 + $0xc0] sm:$0xff]
    %v74 = vld [vmem:[#allocation6 + $0xc8] sm:$0xff]
    %v75 = vld [vmem:[#allocation6 + $0xd0] sm:$0xff]
    %v76 = vld [vmem:[#allocation6 + $0xd8] sm:$0xff]
    %v77 = vld [vmem:[#allocation6 + $0xe0] sm:$0xff]
    %v78 = vld [vmem:[#allocation6 + $0xe8] sm:$0xff]
    %v79 = vld [vmem:[#allocation6 + $0xf0] sm:$0xff]
    %v80 = vld [vmem:[#allocation6 + $0xf8] sm:$0xff]
    %v81 = vld [vmem:[%s2] sm:$0x1]
    %v83 = vlaneseq
    %v84 = vshrl.u32 %v83, 7
    %v85 = vsub.s32 0, %v84
    %v86 = vrot.slane %v81, %v85
    %v88 = vld [vmem:[#allocation2] sm:$0xff]
    %v89 = vld [vmem:[#allocation2 + $0x8] sm:$0xff]
    %v90 = vld [vmem:[#allocation3] sm:$0xff]
    %v91 = vld [vmem:[#allocation3 + $0x8] sm:$0xff]
    %92 = vmatprep.subr.mxu0 0.0
    %93 = vmatpush1.msra.mxu0 %v64
    %94 = vmatprep.subr.mxu0 0.0
    %95 = vmatpush1.msra.mxu0 %v63
    %96 = vmatprep.subr.mxu0 0.0
    %97 = vmatpush1.msra.mxu0 %v62
    %98 = vmatprep.subr.mxu0 0.0
    %99 = vmatpush1.msra.mxu0 %v61
    %100 = vmatprep.subr.mxu0 0.0
    %101 = vmatpush1.msra.mxu0 %v60
    %102 = vmatprep.subr.mxu0 0.0
    %103 = vmatpush1.msra.mxu0 %v59
    %104 = vmatprep.subr.mxu0 0.0
    %105 = vmatpush1.msra.mxu0 %v58
    %106 = vmatprep.subr.mxu0 0.0
    %107 = vmatpush1.msra.mxu0 %v57
    %108 = vmatprep.subr.mxu0 0.0
    %109 = vmatpush1.msra.mxu0 %v56
    %110 = vmatprep.subr.mxu0 0.0
    %111 = vmatpush1.msra.mxu0 %v55
    %112 = vmatprep.subr.mxu0 0.0
    %113 = vmatpush1.msra.mxu0 %v54
    %114 = vmatprep.subr.mxu0 0.0
    %115 = vmatpush1.msra.mxu0 %v53
    %116 = vmatprep.subr.mxu0 0.0
    %117 = vmatpush1.msra.mxu0 %v52
    %118 = vmatprep.subr.mxu0 0.0
    %119 = vmatpush1.msra.mxu0 %v51
    %120 = vmatprep.subr.mxu0 0.0
    %121 = vmatpush1.msra.mxu0 %v50
    %122 = vmatprep.subr.mxu0 0.0
    %123 = vmatpush1.msra.mxu0 %v49
    %124 = vmatprep.subr.mxu0 0.0
    %125 = vmatpush2.msra.mxu0 %v80
    %126 = vmatprep.subr.mxu0 0.0
    %127 = vmatpush2.msra.mxu0 %v79
    %128 = vmatprep.subr.mxu0 0.0
    %129 = vmatpush2.msra.mxu0 %v78
    %130 = vmatprep.subr.mxu0 0.0
    %131 = vmatpush2.msra.mxu0 %v77
    %132 = vmatprep.subr.mxu0 0.0
    %133 = vmatpush2.msra.mxu0 %v76
    %134 = vmatprep.subr.mxu0 0.0
    %135 = vmatpush2.msra.mxu0 %v75
    %136 = vmatprep.subr.mxu0 0.0
    %137 = vmatpush2.msra.mxu0 %v74
    %138 = vmatprep.subr.mxu0 0.0
    %139 = vmatpush2.msra.mxu0 %v73
    %140 = vmatprep.subr.mxu0 0.0
    %141 = vmatpush2.msra.mxu0 %v72
    %142 = vmatprep.subr.mxu0 0.0
    %143 = vmatpush2.msra.mxu0 %v71
    %144 = vmatprep.subr.mxu0 0.0
    %145 = vmatpush2.msra.mxu0 %v70
    %146 = vmatprep.subr.mxu0 0.0
    %147 = vmatpush2.msra.mxu0 %v69
    %148 = vmatprep.subr.mxu0 0.0
    %149 = vmatpush2.msra.mxu0 %v68
    %150 = vmatprep.subr.mxu0 0.0
    %151 = vmatpush2.msra.mxu0 %v67
    %152 = vmatprep.subr.mxu0 0.0
    %153 = vmatpush2.msra.mxu0 %v66
    %154 = vmatprep.subr.mxu0 0.0
    %155 = vmatpush2.msra.mxu0 %v65
    %156 = vmatprep.mubr.f32.mxu0 %v88
    %157 = vmatmul.mubr.f32.gmra.mxu0 %v90
    %v158 = vpop.f32.mrf.mxu0
    %v159 = vadd.f32 %v86, %v158
    %v160 = vpop.f32.mrf.mxu0
    %161 = vmatprep.mubr.f32.mxu0 %v89
    %162 = vmatmul.mubr.f32.gmra.mxu0 %v91
    %v163 = vpop.f32.mrf.mxu0
    %v164 = vadd.f32 %v86, %v163
    %v165 = vpop.f32.mrf.mxu0
    %166 = vdwg.mxu0
    %v167 = vtanh.pop %v159
    %v168 = vtanh.pop %v164
    %169 = vst [vmem:[#allocation8] sm:$0xff] %v167
    %170 = vst [vmem:[#allocation8 + $0x8] sm:$0xff] %v168
    %s171 = scalar_lea.vmem [#allocation3], 16
    %v172 = vld [vmem:[%s171] sm:$0xff]
    %v173 = vld [vmem:[%s171 + $0x8] sm:$0xff]
    %174 = vmatprep.subr.mxu0 0.0
    %175 = vmatpush1.msra.mxu0 %v64
    %176 = vmatprep.subr.mxu0 0.0
    %177 = vmatpush1.msra.mxu0 %v63
    %178 = vmatprep.subr.mxu0 0.0
    %179 = vmatpush1.msra.mxu0 %v62
    %180 = vmatprep.subr.mxu0 0.0
    %181 = vmatpush1.msra.mxu0 %v61
    %182 = vmatprep.subr.mxu0 0.0
    %183 = vmatpush1.msra.mxu0 %v60
    %184 = vmatprep.subr.mxu0 0.0
    %185 = vmatpush1.msra.mxu0 %v59
    %186 = vmatprep.subr.mxu0 0.0
    %187 = vmatpush1.msra.mxu0 %v58
    %188 = vmatprep.subr.mxu0 0.0
    %189 = vmatpush1.msra.mxu0 %v57
    %190 = vmatprep.subr.mxu0 0.0
    %191 = vmatpush1.msra.mxu0 %v56
    %192 = vmatprep.subr.mxu0 0.0
    %193 = vmatpush1.msra.mxu0 %v55
    %194 = vmatprep.subr.mxu0 0.0
    %195 = vmatpush1.msra.mxu0 %v54
    %196 = vmatprep.subr.mxu0 0.0
    %197 = vmatpush1.msra.mxu0 %v53
    %198 = vmatprep.subr.mxu0 0.0
    %199 = vmatpush1.msra.mxu0 %v52
    %200 = vmatprep.subr.mxu0 0.0
    %201 = vmatpush1.msra.mxu0 %v51
    %202 = vmatprep.subr.mxu0 0.0
    %203 = vmatpush1.msra.mxu0 %v50
    %204 = vmatprep.subr.mxu0 0.0
    %205 = vmatpush1.msra.mxu0 %v49
    %206 = vmatprep.subr.mxu0 0.0
    %207 = vmatpush2.msra.mxu0 %v80
    %208 = vmatprep.subr.mxu0 0.0
    %209 = vmatpush2.msra.mxu0 %v79
    %210 = vmatprep.subr.mxu0 0.0
    %211 = vmatpush2.msra.mxu0 %v78
    %212 = vmatprep.subr.mxu0 0.0
    %213 = vmatpush2.msra.mxu0 %v77
    %214 = vmatprep.subr.mxu0 0.0
    %215 = vmatpush2.msra.mxu0 %v76
    %216 = vmatprep.subr.mxu0 0.0
    %217 = vmatpush2.msra.mxu0 %v75
    %218 = vmatprep.subr.mxu0 0.0
    %219 = vmatpush2.msra.mxu0 %v74
    %220 = vmatprep.subr.mxu0 0.0
    %221 = vmatpush2.msra.mxu0 %v73
    %222 = vmatprep.subr.mxu0 0.0
    %223 = vmatpush2.msra.mxu0 %v72
    %224 = vmatprep.subr.mxu0 0.0
    %225 = vmatpush2.msra.mxu0 %v71
    %226 = vmatprep.subr.mxu0 0.0
    %227 = vmatpush2.msra.mxu0 %v70
    %228 = vmatprep.subr.mxu0 0.0
    %229 = vmatpush2.msra.mxu0 %v69
    %230 = vmatprep.subr.mxu0 0.0
    %231 = vmatpush2.msra.mxu0 %v68
    %232 = vmatprep.subr.mxu0 0.0
    %233 = vmatpush2.msra.mxu0 %v67
    %234 = vmatprep.subr.mxu0 0.0
    %235 = vmatpush2.msra.mxu0 %v66
    %236 = vmatprep.subr.mxu0 0.0
    %237 = vmatpush2.msra.mxu0 %v65
    %238 = vmatprep.mubr.f32.mxu0 %v167
    %239 = vmatmul.mubr.f32.gmra.mxu0 %v172
    %v240 = vpop.f32.mrf.mxu0
    %v241 = vadd.f32 %v86, %v240
    %v242 = vpop.f32.mrf.mxu0
    %243 = vmatprep.mubr.f32.mxu0 %v168
    %244 = vmatmul.mubr.f32.gmra.mxu0 %v173
    %v245 = vpop.f32.mrf.mxu0
    %v246 = vadd.f32 %v86, %v245
    %v247 = vpop.f32.mrf.mxu0
    %248 = vdwg.mxu0
    %v249 = vtanh.pop %v241
    %v250 = vtanh.pop %v246
    %s251 = scalar_lea.vmem [#allocation8], 16
    %252 = vst [vmem:[%s251] sm:$0xff] %v249
    %253 = vst [vmem:[%s251 + $0x8] sm:$0xff] %v250
    %s254 = scalar_lea.vmem [#allocation3], 32
    %v255 = vld [vmem:[%s254] sm:$0xff]
    %v256 = vld [vmem:[%s254 + $0x8] sm:$0xff]
    %257 = vmatprep.subr.mxu0 0.0
    %258 = vmatpush1.msra.mxu0 %v64
    %259 = vmatprep.subr.mxu0 0.0
    %260 = vmatpush1.msra.mxu0 %v63
    %261 = vmatprep.subr.mxu0 0.0
    %262 = vmatpush1.msra.mxu0 %v62
    %263 = vmatprep.subr.mxu0 0.0
    %264 = vmatpush1.msra.mxu0 %v61
    %265 = vmatprep.subr.mxu0 0.0
    %266 = vmatpush1.msra.mxu0 %v60
    %267 = vmatprep.subr.mxu0 0.0
    %268 = vmatpush1.msra.mxu0 %v59
    %269 = vmatprep.subr.mxu0 0.0
    %270 = vmatpush1.msra.mxu0 %v58
    %271 = vmatprep.subr.mxu0 0.0
    %272 = vmatpush1.msra.mxu0 %v57
    %273 = vmatprep.subr.mxu0 0.0
    %274 = vmatpush1.msra.mxu0 %v56
    %275 = vmatprep.subr.mxu0 0.0
    %276 = vmatpush1.msra.mxu0 %v55
    %277 = vmatprep.subr.mxu0 0.0
    %278 = vmatpush1.msra.mxu0 %v54
    %279 = vmatprep.subr.mxu0 0.0
    %280 = vmatpush1.msra.mxu0 %v53
    %281 = vmatprep.subr.mxu0 0.0
    %282 = vmatpush1.msra.mxu0 %v52
    %283 = vmatprep.subr.mxu0 0.0
    %284 = vmatpush1.msra.mxu0 %v51
    %285 = vmatprep.subr.mxu0 0.0
    %286 = vmatpush1.msra.mxu0 %v50
    %287 = vmatprep.subr.mxu0 0.0
    %288 = vmatpush1.msra.mxu0 %v49
    %289 = vmatprep.subr.mxu0 0.0
    %290 = vmatpush2.msra.mxu0 %v80
    %291 = vmatprep.subr.mxu0 0.0
    %292 = vmatpush2.msra.mxu0 %v79
    %293 = vmatprep.subr.mxu0 0.0
    %294 = vmatpush2.msra.mxu0 %v78
    %295 = vmatprep.subr.mxu0 0.0
    %296 = vmatpush2.msra.mxu0 %v77
    %297 = vmatprep.subr.mxu0 0.0
    %298 = vmatpush2.msra.mxu0 %v76
    %299 = vmatprep.subr.mxu0 0.0
    %300 = vmatpush2.msra.mxu0 %v75
    %301 = vmatprep.subr.mxu0 0.0
    %302 = vmatpush2.msra.mxu0 %v74
    %303 = vmatprep.subr.mxu0 0.0
    %304 = vmatpush2.msra.mxu0 %v73
    %305 = vmatprep.subr.mxu0 0.0
    %306 = vmatpush2.msra.mxu0 %v72
    %307 = vmatprep.subr.mxu0 0.0
    %308 = vmatpush2.msra.mxu0 %v71
    %309 = vmatprep.subr.mxu0 0.0
    %310 = vmatpush2.msra.mxu0 %v70
    %311 = vmatprep.subr.mxu0 0.0
    %312 = vmatpush2.msra.mxu0 %v69
    %313 = vmatprep.subr.mxu0 0.0
    %314 = vmatpush2.msra.mxu0 %v68
    %315 = vmatprep.subr.mxu0 0.0
    %316 = vmatpush2.msra.mxu0 %v67
    %317 = vmatprep.subr.mxu0 0.0
    %318 = vmatpush2.msra.mxu0 %v66
    %319 = vmatprep.subr.mxu0 0.0
    %320 = vmatpush2.msra.mxu0 %v65
    %321 = vmatprep.mubr.f32.mxu0 %v249
    %322 = vmatmul.mubr.f32.gmra.mxu0 %v255
    %v323 = vpop.f32.mrf.mxu0
    %v324 = vadd.f32 %v86, %v323
    %v325 = vpop.f32.mrf.mxu0
    %326 = vmatprep.mubr.f32.mxu0 %v250
    %327 = vmatmul.mubr.f32.gmra.mxu0 %v256
    %v328 = vpop.f32.mrf.mxu0
    %v329 = vadd.f32 %v86, %v328
    %v330 = vpop.f32.mrf.mxu0
    %331 = vdwg.mxu0
    %v332 = vtanh.pop %v324
    %v333 = vtanh.pop %v329
    %s334 = scalar_lea.vmem [#allocation8], 32
    %335 = vst [vmem:[%s334] sm:$0xff] %v332
    %336 = vst [vmem:[%s334 + $0x8] sm:$0xff] %v333
    %s337 = scalar_lea.vmem [#allocation3], 48
    %v338 = vld [vmem:[%s337] sm:$0xff]
    %v339 = vld [vmem:[%s337 + $0x8] sm:$0xff]
    %340 = vmatprep.subr.mxu0 0.0
    %341 = vmatpush1.msra.mxu0 %v64
    %342 = vmatprep.subr.mxu0 0.0
    %343 = vmatpush1.msra.mxu0 %v63
    %344 = vmatprep.subr.mxu0 0.0
    %345 = vmatpush1.msra.mxu0 %v62
    %346 = vmatprep.subr.mxu0 0.0
    %347 = vmatpush1.msra.mxu0 %v61
    %348 = vmatprep.subr.mxu0 0.0
    %349 = vmatpush1.msra.mxu0 %v60
    %350 = vmatprep.subr.mxu0 0.0
    %351 = vmatpush1.msra.mxu0 %v59
    %352 = vmatprep.subr.mxu0 0.0
    %353 = vmatpush1.msra.mxu0 %v58
    %354 = vmatprep.subr.mxu0 0.0
    %355 = vmatpush1.msra.mxu0 %v57
    %356 = vmatprep.subr.mxu0 0.0
    %357 = vmatpush1.msra.mxu0 %v56
    %358 = vmatprep.subr.mxu0 0.0
    %359 = vmatpush1.msra.mxu0 %v55
    %360 = vmatprep.subr.mxu0 0.0
    %361 = vmatpush1.msra.mxu0 %v54
    %362 = vmatprep.subr.mxu0 0.0
    %363 = vmatpush1.msra.mxu0 %v53
    %364 = vmatprep.subr.mxu0 0.0
    %365 = vmatpush1.msra.mxu0 %v52
    %366 = vmatprep.subr.mxu0 0.0
    %367 = vmatpush1.msra.mxu0 %v51
    %368 = vmatprep.subr.mxu0 0.0
    %369 = vmatpush1.msra.mxu0 %v50
    %370 = vmatprep.subr.mxu0 0.0
    %371 = vmatpush1.msra.mxu0 %v49
    %372 = vmatprep.subr.mxu0 0.0
    %373 = vmatpush2.msra.mxu0 %v80
    %374 = vmatprep.subr.mxu0 0.0
    %375 = vmatpush2.msra.mxu0 %v79
    %376 = vmatprep.subr.mxu0 0.0
    %377 = vmatpush2.msra.mxu0 %v78
    %378 = vmatprep.subr.mxu0 0.0
    %379 = vmatpush2.msra.mxu0 %v77
    %380 = vmatprep.subr.mxu0 0.0
    %381 = vmatpush2.msra.mxu0 %v76
    %382 = vmatprep.subr.mxu0 0.0
    %383 = vmatpush2.msra.mxu0 %v75
    %384 = vmatprep.subr.mxu0 0.0
    %385 = vmatpush2.msra.mxu0 %v74
    %386 = vmatprep.subr.mxu0 0.0
    %387 = vmatpush2.msra.mxu0 %v73
    %388 = vmatprep.subr.mxu0 0.0
    %389 = vmatpush2.msra.mxu0 %v72
    %390 = vmatprep.subr.mxu0 0.0
    %391 = vmatpush2.msra.mxu0 %v71
    %392 = vmatprep.subr.mxu0 0.0
    %393 = vmatpush2.msra.mxu0 %v70
    %394 = vmatprep.subr.mxu0 0.0
    %395 = vmatpush2.msra.mxu0 %v69
    %396 = vmatprep.subr.mxu0 0.0
    %397 = vmatpush2.msra.mxu0 %v68
    %398 = vmatprep.subr.mxu0 0.0
    %399 = vmatpush2.msra.mxu0 %v67
    %400 = vmatprep.subr.mxu0 0.0
    %401 = vmatpush2.msra.mxu0 %v66
    %402 = vmatprep.subr.mxu0 0.0
    %403 = vmatpush2.msra.mxu0 %v65
    %404 = vmatprep.mubr.f32.mxu0 %v332
    %405 = vmatmul.mubr.f32.gmra.mxu0 %v338
    %v406 = vpop.f32.mrf.mxu0
    %v407 = vadd.f32 %v86, %v406
    %v408 = vpop.f32.mrf.mxu0
    %409 = vmatprep.mubr.f32.mxu0 %v333
    %410 = vmatmul.mubr.f32.gmra.mxu0 %v339
    %v411 = vpop.f32.mrf.mxu0
    %v412 = vadd.f32 %v86, %v411
    %v413 = vpop.f32.mrf.mxu0
    %414 = vdwg.mxu0
    %v415 = vtanh.pop %v407
    %v416 = vtanh.pop %v412
    %s417 = scalar_lea.vmem [#allocation8], 48
    %418 = vst [vmem:[%s417] sm:$0xff] %v415
    %419 = vst [vmem:[%s417 + $0x8] sm:$0xff] %v416
    %s420 = scalar_lea.vmem [#allocation3], 64
    %v421 = vld [vmem:[%s420] sm:$0xff]
    %v422 = vld [vmem:[%s420 + $0x8] sm:$0xff]
    %423 = vmatprep.subr.mxu0 0.0
    %424 = vmatpush1.msra.mxu0 %v64
    %425 = vmatprep.subr.mxu0 0.0
    %426 = vmatpush1.msra.mxu0 %v63
    %427 = vmatprep.subr.mxu0 0.0
    %428 = vmatpush1.msra.mxu0 %v62
    %429 = vmatprep.subr.mxu0 0.0
    %430 = vmatpush1.msra.mxu0 %v61
    %431 = vmatprep.subr.mxu0 0.0
    %432 = vmatpush1.msra.mxu0 %v60
    %433 = vmatprep.subr.mxu0 0.0
    %434 = vmatpush1.msra.mxu0 %v59
    %435 = vmatprep.subr.mxu0 0.0
    %436 = vmatpush1.msra.mxu0 %v58
    %437 = vmatprep.subr.mxu0 0.0
    %438 = vmatpush1.msra.mxu0 %v57
    %439 = vmatprep.subr.mxu0 0.0
    %440 = vmatpush1.msra.mxu0 %v56
    %441 = vmatprep.subr.mxu0 0.0
    %442 = vmatpush1.msra.mxu0 %v55
    %443 = vmatprep.subr.mxu0 0.0
    %444 = vmatpush1.msra.mxu0 %v54
    %445 = vmatprep.subr.mxu0 0.0
    %446 = vmatpush1.msra.mxu0 %v53
    %447 = vmatprep.subr.mxu0 0.0
    %448 = vmatpush1.msra.mxu0 %v52
    %449 = vmatprep.subr.mxu0 0.0
    %450 = vmatpush1.msra.mxu0 %v51
    %451 = vmatprep.subr.mxu0 0.0
    %452 = vmatpush1.msra.mxu0 %v50
    %453 = vmatprep.subr.mxu0 0.0
    %454 = vmatpush1.msra.mxu0 %v49
    %455 = vmatprep.subr.mxu0 0.0
    %456 = vmatpush2.msra.mxu0 %v80
    %457 = vmatprep.subr.mxu0 0.0
    %458 = vmatpush2.msra.mxu0 %v79
    %459 = vmatprep.subr.mxu0 0.0
    %460 = vmatpush2.msra.mxu0 %v78
    %461 = vmatprep.subr.mxu0 0.0
    %462 = vmatpush2.msra.mxu0 %v77
    %463 = vmatprep.subr.mxu0 0.0
    %464 = vmatpush2.msra.mxu0 %v76
    %465 = vmatprep.subr.mxu0 0.0
    %466 = vmatpush2.msra.mxu0 %v75
    %467 = vmatprep.subr.mxu0 0.0
    %468 = vmatpush2.msra.mxu0 %v74
    %469 = vmatprep.subr.mxu0 0.0
    %470 = vmatpush2.msra.mxu0 %v73
    %471 = vmatprep.subr.mxu0 0.0
    %472 = vmatpush2.msra.mxu0 %v72
    %473 = vmatprep.subr.mxu0 0.0
    %474 = vmatpush2.msra.mxu0 %v71
    %475 = vmatprep.subr.mxu0 0.0
    %476 = vmatpush2.msra.mxu0 %v70
    %477 = vmatprep.subr.mxu0 0.0
    %478 = vmatpush2.msra.mxu0 %v69
    %479 = vmatprep.subr.mxu0 0.0
    %480 = vmatpush2.msra.mxu0 %v68
    %481 = vmatprep.subr.mxu0 0.0
    %482 = vmatpush2.msra.mxu0 %v67
    %483 = vmatprep.subr.mxu0 0.0
    %484 = vmatpush2.msra.mxu0 %v66
    %485 = vmatprep.subr.mxu0 0.0
    %486 = vmatpush2.msra.mxu0 %v65
    %487 = vmatprep.mubr.f32.mxu0 %v415
    %488 = vmatmul.mubr.f32.gmra.mxu0 %v421
    %v489 = vpop.f32.mrf.mxu0
    %v490 = vadd.f32 %v86, %v489
    %v491 = vpop.f32.mrf.mxu0
    %492 = vmatprep.mubr.f32.mxu0 %v416
    %493 = vmatmul.mubr.f32.gmra.mxu0 %v422
    %v494 = vpop.f32.mrf.mxu0
    %v495 = vadd.f32 %v86, %v494
    %v496 = vpop.f32.mrf.mxu0
    %497 = vdwg.mxu0
    %v498 = vtanh.pop %v490
    %v499 = vtanh.pop %v495
    %s500 = scalar_lea.vmem [#allocation8], 64
    %501 = vst [vmem:[%s500] sm:$0xff] %v498
    %502 = vst [vmem:[%s500 + $0x8] sm:$0xff] %v499
    %s503 = scalar_lea.vmem [#allocation3], 80
    %v504 = vld [vmem:[%s503] sm:$0xff]
    %v505 = vld [vmem:[%s503 + $0x8] sm:$0xff]
    %506 = vmatprep.subr.mxu0 0.0
    %507 = vmatpush1.msra.mxu0 %v64
    %508 = vmatprep.subr.mxu0 0.0
    %509 = vmatpush1.msra.mxu0 %v63
    %510 = vmatprep.subr.mxu0 0.0
    %511 = vmatpush1.msra.mxu0 %v62
    %512 = vmatprep.subr.mxu0 0.0
    %513 = vmatpush1.msra.mxu0 %v61
    %514 = vmatprep.subr.mxu0 0.0
    %515 = vmatpush1.msra.mxu0 %v60
    %516 = vmatprep.subr.mxu0 0.0
    %517 = vmatpush1.msra.mxu0 %v59
    %518 = vmatprep.subr.mxu0 0.0
    %519 = vmatpush1.msra.mxu0 %v58
    %520 = vmatprep.subr.mxu0 0.0
    %521 = vmatpush1.msra.mxu0 %v57
    %522 = vmatprep.subr.mxu0 0.0
    %523 = vmatpush1.msra.mxu0 %v56
    %524 = vmatprep.subr.mxu0 0.0
    %525 = vmatpush1.msra.mxu0 %v55
    %526 = vmatprep.subr.mxu0 0.0
    %527 = vmatpush1.msra.mxu0 %v54
    %528 = vmatprep.subr.mxu0 0.0
    %529 = vmatpush1.msra.mxu0 %v53
    %530 = vmatprep.subr.mxu0 0.0
    %531 = vmatpush1.msra.mxu0 %v52
    %532 = vmatprep.subr.mxu0 0.0
    %533 = vmatpush1.msra.mxu0 %v51
    %534 = vmatprep.subr.mxu0 0.0
    %535 = vmatpush1.msra.mxu0 %v50
    %536 = vmatprep.subr.mxu0 0.0
    %537 = vmatpush1.msra.mxu0 %v49
    %538 = vmatprep.subr.mxu0 0.0
    %539 = vmatpush2.msra.mxu0 %v80
    %540 = vmatprep.subr.mxu0 0.0
    %541 = vmatpush2.msra.mxu0 %v79
    %542 = vmatprep.subr.mxu0 0.0
    %543 = vmatpush2.msra.mxu0 %v78
    %544 = vmatprep.subr.mxu0 0.0
    %545 = vmatpush2.msra.mxu0 %v77
    %546 = vmatprep.subr.mxu0 0.0
    %547 = vmatpush2.msra.mxu0 %v76
    %548 = vmatprep.subr.mxu0 0.0
    %549 = vmatpush2.msra.mxu0 %v75
    %550 = vmatprep.subr.mxu0 0.0
    %551 = vmatpush2.msra.mxu0 %v74
    %552 = vmatprep.subr.mxu0 0.0
    %553 = vmatpush2.msra.mxu0 %v73
    %554 = vmatprep.subr.mxu0 0.0
    %555 = vmatpush2.msra.mxu0 %v72
    %556 = vmatprep.subr.mxu0 0.0
    %557 = vmatpush2.msra.mxu0 %v71
    %558 = vmatprep.subr.mxu0 0.0
    %559 = vmatpush2.msra.mxu0 %v70
    %560 = vmatprep.subr.mxu0 0.0
    %561 = vmatpush2.msra.mxu0 %v69
    %562 = vmatprep.subr.mxu0 0.0
    %563 = vmatpush2.msra.mxu0 %v68
    %564 = vmatprep.subr.mxu0 0.0
    %565 = vmatpush2.msra.mxu0 %v67
    %566 = vmatprep.subr.mxu0 0.0
    %567 = vmatpush2.msra.mxu0 %v66
    %568 = vmatprep.subr.mxu0 0.0
    %569 = vmatpush2.msra.mxu0 %v65
    %570 = vmatprep.mubr.f32.mxu0 %v498
    %571 = vmatmul.mubr.f32.gmra.mxu0 %v504
    %v572 = vpop.f32.mrf.mxu0
    %v573 = vadd.f32 %v86, %v572
    %v574 = vpop.f32.mrf.mxu0
    %575 = vmatprep.mubr.f32.mxu0 %v499
    %576 = vmatmul.mubr.f32.gmra.mxu0 %v505
    %v577 = vpop.f32.mrf.mxu0
    %v578 = vadd.f32 %v86, %v577
    %v579 = vpop.f32.mrf.mxu0
    %580 = vdwg.mxu0
    %v581 = vtanh.pop %v573
    %v582 = vtanh.pop %v578
    %s583 = scalar_lea.vmem [#allocation8], 80
    %584 = vst [vmem:[%s583] sm:$0xff] %v581
    %585 = vst [vmem:[%s583 + $0x8] sm:$0xff] %v582
    %s586 = scalar_lea.vmem [#allocation3], 96
    %v587 = vld [vmem:[%s586] sm:$0xff]
    %v588 = vld [vmem:[%s586 + $0x8] sm:$0xff]
    %589 = vmatprep.subr.mxu0 0.0
    %590 = vmatpush1.msra.mxu0 %v64
    %591 = vmatprep.subr.mxu0 0.0
    %592 = vmatpush1.msra.mxu0 %v63
    %593 = vmatprep.subr.mxu0 0.0
    %594 = vmatpush1.msra.mxu0 %v62
    %595 = vmatprep.subr.mxu0 0.0
    %596 = vmatpush1.msra.mxu0 %v61
    %597 = vmatprep.subr.mxu0 0.0
    %598 = vmatpush1.msra.mxu0 %v60
    %599 = vmatprep.subr.mxu0 0.0
    %600 = vmatpush1.msra.mxu0 %v59
    %601 = vmatprep.subr.mxu0 0.0
    %602 = vmatpush1.msra.mxu0 %v58
    %603 = vmatprep.subr.mxu0 0.0
    %604 = vmatpush1.msra.mxu0 %v57
    %605 = vmatprep.subr.mxu0 0.0
    %606 = vmatpush1.msra.mxu0 %v56
    %607 = vmatprep.subr.mxu0 0.0
    %608 = vmatpush1.msra.mxu0 %v55
    %609 = vmatprep.subr.mxu0 0.0
    %610 = vmatpush1.msra.mxu0 %v54
    %611 = vmatprep.subr.mxu0 0.0
    %612 = vmatpush1.msra.mxu0 %v53
    %613 = vmatprep.subr.mxu0 0.0
    %614 = vmatpush1.msra.mxu0 %v52
    %615 = vmatprep.subr.mxu0 0.0
    %616 = vmatpush1.msra.mxu0 %v51
    %617 = vmatprep.subr.mxu0 0.0
    %618 = vmatpush1.msra.mxu0 %v50
    %619 = vmatprep.subr.mxu0 0.0
    %620 = vmatpush1.msra.mxu0 %v49
    %621 = vmatprep.subr.mxu0 0.0
    %622 = vmatpush2.msra.mxu0 %v80
    %623 = vmatprep.subr.mxu0 0.0
    %624 = vmatpush2.msra.mxu0 %v79
    %625 = vmatprep.subr.mxu0 0.0
    %626 = vmatpush2.msra.mxu0 %v78
    %627 = vmatprep.subr.mxu0 0.0
    %628 = vmatpush2.msra.mxu0 %v77
    %629 = vmatprep.subr.mxu0 0.0
    %630 = vmatpush2.msra.mxu0 %v76
    %631 = vmatprep.subr.mxu0 0.0
    %632 = vmatpush2.msra.mxu0 %v75
    %633 = vmatprep.subr.mxu0 0.0
    %634 = vmatpush2.msra.mxu0 %v74
    %635 = vmatprep.subr.mxu0 0.0
    %636 = vmatpush2.msra.mxu0 %v73
    %637 = vmatprep.subr.mxu0 0.0
    %638 = vmatpush2.msra.mxu0 %v72
    %639 = vmatprep.subr.mxu0 0.0
    %640 = vmatpush2.msra.mxu0 %v71
    %641 = vmatprep.subr.mxu0 0.0
    %642 = vmatpush2.msra.mxu0 %v70
    %643 = vmatprep.subr.mxu0 0.0
    %644 = vmatpush2.msra.mxu0 %v69
    %645 = vmatprep.subr.mxu0 0.0
    %646 = vmatpush2.msra.mxu0 %v68
    %647 = vmatprep.subr.mxu0 0.0
    %648 = vmatpush2.msra.mxu0 %v67
    %649 = vmatprep.subr.mxu0 0.0
    %650 = vmatpush2.msra.mxu0 %v66
    %651 = vmatprep.subr.mxu0 0.0
    %652 = vmatpush2.msra.mxu0 %v65
    %653 = vmatprep.mubr.f32.mxu0 %v581
    %654 = vmatmul.mubr.f32.gmra.mxu0 %v587
    %v655 = vpop.f32.mrf.mxu0
    %v656 = vadd.f32 %v86, %v655
    %v657 = vpop.f32.mrf.mxu0
    %658 = vmatprep.mubr.f32.mxu0 %v582
    %659 = vmatmul.mubr.f32.gmra.mxu0 %v588
    %v660 = vpop.f32.mrf.mxu0
    %v661 = vadd.f32 %v86, %v660
    %v662 = vpop.f32.mrf.mxu0
    %663 = vdwg.mxu0
    %v664 = vtanh.pop %v656
    %v665 = vtanh.pop %v661
    %s666 = scalar_lea.vmem [#allocation8], 96
    %667 = vst [vmem:[%s666] sm:$0xff] %v664
    %668 = vst [vmem:[%s666 + $0x8] sm:$0xff] %v665
    %s669 = scalar_lea.vmem [#allocation3], 112
    %v670 = vld [vmem:[%s669] sm:$0xff]
    %v671 = vld [vmem:[%s669 + $0x8] sm:$0xff]
    %672 = vmatprep.subr.mxu0 0.0
    %673 = vmatpush1.msra.mxu0 %v64
    %674 = vmatprep.subr.mxu0 0.0
    %675 = vmatpush1.msra.mxu0 %v63
    %676 = vmatprep.subr.mxu0 0.0
    %677 = vmatpush1.msra.mxu0 %v62
    %678 = vmatprep.subr.mxu0 0.0
    %679 = vmatpush1.msra.mxu0 %v61
    %680 = vmatprep.subr.mxu0 0.0
    %681 = vmatpush1.msra.mxu0 %v60
    %682 = vmatprep.subr.mxu0 0.0
    %683 = vmatpush1.msra.mxu0 %v59
    %684 = vmatprep.subr.mxu0 0.0
    %685 = vmatpush1.msra.mxu0 %v58
    %686 = vmatprep.subr.mxu0 0.0
    %687 = vmatpush1.msra.mxu0 %v57
    %688 = vmatprep.subr.mxu0 0.0
    %689 = vmatpush1.msra.mxu0 %v56
    %690 = vmatprep.subr.mxu0 0.0
    %691 = vmatpush1.msra.mxu0 %v55
    %692 = vmatprep.subr.mxu0 0.0
    %693 = vmatpush1.msra.mxu0 %v54
    %694 = vmatprep.subr.mxu0 0.0
    %695 = vmatpush1.msra.mxu0 %v53
    %696 = vmatprep.subr.mxu0 0.0
    %697 = vmatpush1.msra.mxu0 %v52
    %698 = vmatprep.subr.mxu0 0.0
    %699 = vmatpush1.msra.mxu0 %v51
    %700 = vmatprep.subr.mxu0 0.0
    %701 = vmatpush1.msra.mxu0 %v50
    %702 = vmatprep.subr.mxu0 0.0
    %703 = vmatpush1.msra.mxu0 %v49
    %704 = vmatprep.subr.mxu0 0.0
    %705 = vmatpush2.msra.mxu0 %v80
    %706 = vmatprep.subr.mxu0 0.0
    %707 = vmatpush2.msra.mxu0 %v79
    %708 = vmatprep.subr.mxu0 0.0
    %709 = vmatpush2.msra.mxu0 %v78
    %710 = vmatprep.subr.mxu0 0.0
    %711 = vmatpush2.msra.mxu0 %v77
    %712 = vmatprep.subr.mxu0 0.0
    %713 = vmatpush2.msra.mxu0 %v76
    %714 = vmatprep.subr.mxu0 0.0
    %715 = vmatpush2.msra.mxu0 %v75
    %716 = vmatprep.subr.mxu0 0.0
    %717 = vmatpush2.msra.mxu0 %v74
    %718 = vmatprep.subr.mxu0 0.0
    %719 = vmatpush2.msra.mxu0 %v73
    %720 = vmatprep.subr.mxu0 0.0
    %721 = vmatpush2.msra.mxu0 %v72
    %722 = vmatprep.subr.mxu0 0.0
    %723 = vmatpush2.msra.mxu0 %v71
    %724 = vmatprep.subr.mxu0 0.0
    %725 = vmatpush2.msra.mxu0 %v70
    %726 = vmatprep.subr.mxu0 0.0
    %727 = vmatpush2.msra.mxu0 %v69
    %728 = vmatprep.subr.mxu0 0.0
    %729 = vmatpush2.msra.mxu0 %v68
    %730 = vmatprep.subr.mxu0 0.0
    %731 = vmatpush2.msra.mxu0 %v67
    %732 = vmatprep.subr.mxu0 0.0
    %733 = vmatpush2.msra.mxu0 %v66
    %734 = vmatprep.subr.mxu0 0.0
    %735 = vmatpush2.msra.mxu0 %v65
    %736 = vmatprep.mubr.f32.mxu0 %v664
    %737 = vmatmul.mubr.f32.gmra.mxu0 %v670
    %v738 = vpop.f32.mrf.mxu0
    %v739 = vadd.f32 %v86, %v738
    %v740 = vpop.f32.mrf.mxu0
    %741 = vmatprep.mubr.f32.mxu0 %v665
    %742 = vmatmul.mubr.f32.gmra.mxu0 %v671
    %v743 = vpop.f32.mrf.mxu0
    %v744 = vadd.f32 %v86, %v743
    %v745 = vpop.f32.mrf.mxu0
    %746 = vdwg.mxu0
    %v747 = vtanh.pop %v739
    %v748 = vtanh.pop %v744
    %s749 = scalar_lea.vmem [#allocation8], 112
    %750 = vst [vmem:[%s749] sm:$0xff] %v747
    %751 = vst [vmem:[%s749 + $0x8] sm:$0xff] %v748
    %752 = vst [vmem:[#allocation2] sm:$0xff] %v747
    %753 = vst [vmem:[#allocation2 + $0x8] sm:$0xff] %v748
    // Predicated region
    $region26: #{tpu_custom_call.1} parent=1 // pred_check
      _
    $region27: #{tpu_custom_call.1} parent=1 // pred_check_branch
      %755 = sbr.rel (0) target = $region29
    $region28: #{tpu_custom_call.1} parent=1 // pred_region
      %s757 = ssub.s32 2048, 2048
      %758 = vsyncadd [#allocation5], %s757
      %s759 = sshll.u32 [#allocation8], 4
      %s760 = int_to_ptr.vmem [resolvable:$true] %s759
      %765 = dma.vmem_to_hbm [thread:$0]  %s760, 2048, %s3, [#allocation5], 128, 128, 8
    $region29: #{tpu_custom_call.1} parent=1 // pred_fallthru
      _
    // Predicated region
    $region30: #{tpu_custom_call.1} parent=1 // pred_check
      _
    $region31: #{tpu_custom_call.1} parent=1 // pred_check_branch
      %767 = sbr.rel (0) target = $region33
    $region32: #{tpu_custom_call.1} parent=1 // pred_region
      %768 = dma.done [#allocation5], 2048
    $region33: #{tpu_custom_call.1} parent=1 // pred_fallthru
      _
    %769 = vsyncpa [#allocation4], 1
    %770 = vsyncpa [#allocation7], 1
    %771 = vsyncpa [#allocation5], 1

</llo_original>
